<compile_context>
chip_gen: v7x
topology: tpu7x:2x2x1
jax: 0.10.0
libtpu: 0.0.40
codegen_flags: <defaults>
</compile_context>

<pallas_src>
import jax
import jax.numpy as jnp
from jax import lax
from jax.experimental import pallas as pl
from jax.experimental.pallas import tpu as pltpu


_MAX_LANE_TILE = 32 * 1024     # cap on tHW (bounds the in-kernel 128-lane-group unroll)
_MIN_SEG_BYTES = 2048          # preferred HBM DMA segment size per (batch,channel) row


def _pad_to(v, m):
    return ((v + m - 1) // m) * m


def _cdiv(a, b):
    return -(-a // b)


def _tpu_info():
    try:
        return pltpu.get_tpu_info()
    except Exception:
        return None


def _vmem_capacity_bytes():
    info = _tpu_info()
    if info is not None:
        cap = getattr(info, "vmem_capacity_bytes", None)
        try:
            cap = int(cap)
            if cap > 0:
                return cap
        except Exception:
            pass
    return 64 * 1024 * 1024  # conservative fallback (v7x per-TC VMEM)


def _num_tensorcores():
    info = _tpu_info()
    if info is not None:
        for name in ("num_cores", "num_tensorcores", "tensorcores_per_chip",
                     "cores_per_chip"):
            v = getattr(info, name, None)
            try:
                v = int(v)
                if v > 0:
                    return v
            except Exception:
                pass
        cap = getattr(info, "vmem_capacity_bytes", None)
        try:
            cap = int(cap)
            if cap > 0:
                # v7x exposes 64 MiB per-TC VMEM and has 2 TensorCores per chip.
                return 2 if cap <= (64 << 20) else 1
        except Exception:
            pass
    dev = jax.devices()[0]
    for name in ("num_cores", "core_count"):
        v = getattr(dev, name, None)
        try:
            v = int(v)
            if v > 0:
                return v
        except Exception:
            pass
    return 1


def _vmem_budgets():
    """Generation-aware (x-stream budget, vmem_limit cap) in bytes."""
    cap = _vmem_capacity_bytes()
    if cap >= (100 << 20):                        # v5e / v6e: 128 MiB physical VMEM
        budget = min(96 << 20, cap - (24 << 20))
        limit_cap = min(116 << 20, cap - (12 << 20))
    else:                                         # v7x (64 MiB) or unknown: stay safe
        budget = max(min(46 << 20, cap - (18 << 20)), cap // 2)
        limit_cap = max(min(56 << 20, cap - (8 << 20)), budget + (4 << 20))
    return budget, limit_cap


def _choose_tiles(B, C1, HW, itemsize, x_budget, prefer_multi_b, max_hw_tile=None):
    """Returns (tB, tHW, direct_mode).

    In lane mode tHW is a multiple of 128 (<= HW); in direct mode tHW == HW
    (single full-spatial chunk, used for ragged HW that fits whole).
    Raises ValueError if nothing fits the VMEM budget (fail loudly).
    """
    C1p = _pad_to(C1, 8)

    lane_cap = HW if HW % 128 == 0 else (HW // 128) * 128
    lane_cap = min(lane_cap, _MAX_LANE_TILE)
    if max_hw_tile is not None:
        lane_cap = min(lane_cap, (max_hw_tile // 128) * 128)

    allow_direct = (HW % 128 != 0) and (max_hw_tile is None or max_hw_tile >= HW)

    # Batch tile must satisfy the output-block sublane rule: full B or multiple of 8.
    tb_cands = [d for d in range(B, 0, -1) if B % d == 0 and (d == B or d % 8 == 0)]

    def lane_cfg(tb):
        if lane_cap < 128:
            return None
        acc_bytes = tb * C1p * 128 * 4                    # f32 lane-partial scratch
        avail = x_budget - acc_bytes
        if avail <= 0:
            return None
        thw = min(avail // (2 * tb * C1p * itemsize), lane_cap)  # x is double-buffered
        thw = int(thw // 128) * 128
        return (tb, thw, False) if thw >= 128 else None

    def direct_cfg(tb):
        hw_pad = _pad_to(HW, 128)
        need = 2 * tb * C1p * hw_pad * itemsize + _pad_to(tb, 8) * _pad_to(C1, 128) * 4
        return (tb, HW, True) if need <= x_budget else None

    cands = []
    for tb in tb_cands:
        cfg = direct_cfg(tb) if allow_direct else None
        if cfg is None:
            cfg = lane_cfg(tb)
        if cfg is not None:
            cands.append(cfg)
    if not cands:
        raise ValueError(
            "Classify pallas kernel: no (tB, tHW) tiling fits the VMEM budget "
            f"(B={B}, C1={C1}, HW={HW}, itemsize={itemsize}, budget={x_budget})")

    # Prefer configs whose per-row HBM segment is >= _MIN_SEG_BYTES (or already at
    # the HW cap). Since smaller tB yields larger tHW, this shrinks tB before tHW.
    def seg_ok(cfg):
        tb, thw, direct = cfg
        return direct or (thw * itemsize >= _MIN_SEG_BYTES) or (thw >= lane_cap)

    pool = [c for c in cands if seg_ok(c)] or cands

    if prefer_multi_b:
        multi = [c for c in pool if B // c[0] >= 2]
        if multi:
            return multi[0]          # largest tB that still gives >= 2 batch tiles
    return pool[0]                   # single-TC chips: just take the largest tB


def _build_classify_kernel(*, tHW, HW, kps, lane_groups, needs_mask, inv_hw):
    def kernel(x_ref, w_ref, b_ref, o_ref, acc_ref):
        # x_ref: (tB, C1, tHW)  w_ref: (C1, C2)  b_ref: (1, C2)
        # o_ref: (1, tB, C2) f32 partial  acc_ref: (tB, C1, 128) or (tB, C1) f32
        s = pl.program_id(0)                 # HW-split index ("parallel")
        k = pl.program_id(2)                 # reduction chunk within the split

        @pl.when(k == 0)
        def _init():
            acc_ref[...] = jnp.zeros_like(acc_ref)

        if lane_groups:
            # Lane-partial accumulation: pure VPU converts/adds per chunk; the
            # cross-lane (128 -> 1) XLU reduce is deferred to the finalize step.
            if needs_mask:
                off = (s * kps + k) * tHW    # intended global element offset
                lane_ids = lax.broadcasted_iota(jnp.int32, (1, 1, 128), 2)
            partial = None
            for j in range(lane_groups):
                xg = x_ref[:, :, j * 128:(j + 1) * 128].astype(jnp.float32)
                if needs_mask:
                    xg = jnp.where(lane_ids + (off + j * 128) < HW, xg, 0.0)
                partial = xg if partial is None else partial + xg
            acc_ref[...] += partial
        else:
            # Direct mode: a single full-spatial chunk (ragged HW that fits whole).
            acc_ref[...] += jnp.sum(x_ref[...], axis=-1, dtype=jnp.float32)

        @pl.when(k == pl.num_programs(2) - 1)
        def _finalize():
            acc = acc_ref[...]
            pooled = (jnp.sum(acc, axis=-1) if lane_groups else acc) * inv_hw  # f32
            out = jnp.dot(pooled, w_ref[...].astype(jnp.float32),
                          preferred_element_type=jnp.float32)
            # Partial outputs are summed in the wrapper: only split 0 adds the bias.
            out = out + b_ref[...].astype(jnp.float32) * (s == 0).astype(jnp.float32)
            o_ref[0, :, :] = out.astype(o_ref.dtype)

    return kernel


def classify_forward(x_nchw, weight, bias, *, max_hw_tile=None, force_hw_splits=None):
    """x_nchw: (B, C1, H, W); weight: (C2, C1, 1, 1); bias: (C2,). Returns (B, C2)."""
    B, C1, H, W = x_nchw.shape
    C2 = weight.shape[0]
    HW = H * W
    itemsize = jnp.dtype(x_nchw.dtype).itemsize

    # Layout-only glue; x keeps its native dtype end-to-end through the DMA.
    x3d = x_nchw.reshape(B, C1, HW)
    w2d = weight.reshape(C2, C1).T            # (C1, C2), native dtype
    b2d = bias.reshape(1, C2)

    C1p, C2p = _pad_to(C1, 8), _pad_to(C2, 128)
    w_buf = C1p * C2p * jnp.dtype(w2d.dtype).itemsize
    b_buf = 8 * C2p * jnp.dtype(b2d.dtype).itemsize
    out_buf = _pad_to(B, 8) * C2p * 4

    budget, limit_cap = _vmem_budgets()
    reserve = 2 * (w_buf + b_buf + out_buf) + (2 << 20)
    x_budget = budget - reserve
    if x_budget < (1 << 20):
        raise ValueError("Classify pallas kernel: weight/bias/output blocks alone "
                         "exhaust the VMEM budget")

    num_cores = _num_tensorcores()
    tB, tHW, direct = _choose_tiles(B, C1, HW, itemsize, x_budget,
                                    prefer_multi_b=(num_cores >= 2),
                                    max_hw_tile=max_hw_tile)
    nB = B // tB
    nK_tot = _cdiv(HW, tHW)

    # If the batch axis alone cannot feed every TensorCore (e.g. B == 1), split
    # the spatial reduction across a leading "parallel" axis instead.
    if force_hw_splits is not None:
        S = max(1, min(int(force_hw_splits), nK_tot))
    elif num_cores >= 2 and nB < num_cores and nK_tot >= 2:
        S = min(num_cores, nK_tot)
    else:
        S = 1
    kps = _cdiv(nK_tot, S)                     # reduction chunks per split
    needs_mask = (S * kps * tHW != HW)         # ragged tail and/or overflow chunks
    lane_groups = (tHW // 128) if (not direct and tHW % 128 == 0) else 0

    kernel = _build_classify_kernel(tHW=tHW, HW=HW, kps=kps, lane_groups=lane_groups,
                                    needs_mask=needs_mask, inv_hw=1.0 / float(HW))

    acc_shape = (tB, C1, 128) if lane_groups else (tB, C1)

    if S * kps > nK_tot:
        # Overflow chunks (only possible when S does not divide nK_tot) are clamped
        # to the last valid block and fully masked to zero inside the kernel.
        x_map = lambda s, b, k: (b, 0, jnp.minimum(s * kps + k, nK_tot - 1))
    else:
        x_map = lambda s, b, k: (b, 0, s * kps + k)

    # VMEM accounting (padded to the (8, 128) physical tiling) -> explicit limit.
    x_blk = tB * C1p * _pad_to(tHW, 128) * itemsize
    acc_bytes = (tB * C1p * 128 if lane_groups
                 else _pad_to(tB, 8) * _pad_to(C1, 128)) * 4
    out_blk = _pad_to(tB, 8) * C2p * 4
    est = 2 * x_blk + 2 * (w_buf + b_buf + out_blk) + acc_bytes
    vmem_limit = int(min(max(int(est * 1.25) + (2 << 20), 8 << 20), limit_cap))

    cost = pl.CostEstimate(
        flops=int(B * C1 * HW + 2 * S * B * C1 * C2),
        transcendentals=0,
        bytes_accessed=int(x3d.size * itemsize
                           + w2d.size * jnp.dtype(w2d.dtype).itemsize
                           + b2d.size * jnp.dtype(b2d.dtype).itemsize
                           + S * B * C2 * 4))

    partials = pl.pallas_call(
        kernel,
        out_shape=jax.ShapeDtypeStruct((S, B, C2), jnp.float32),
        grid=(S, nB, kps),
        in_specs=[
            pl.BlockSpec((tB, C1, tHW), x_map),                  # streamed activations
            pl.BlockSpec((C1, C2), lambda s, b, k: (0, 0)),      # resident weight
            pl.BlockSpec((1, C2), lambda s, b, k: (0, 0)),       # resident bias
        ],
        out_specs=pl.BlockSpec((1, tB, C2), lambda s, b, k: (s, b, 0)),
        scratch_shapes=[pltpu.VMEM(acc_shape, jnp.float32)],
        compiler_params=pltpu.CompilerParams(
            dimension_semantics=("parallel", "parallel", "arbitrary"),
            vmem_limit_bytes=vmem_limit),
        cost_estimate=cost,
    )(x3d, w2d, b2d)

    # One tiny (S, B, C2) -> (B, C2) reduce; a plain pass-through when S == 1.
    return jnp.sum(partials, axis=0).astype(x_nchw.dtype)


def reference_forward(x_nchw, weight, bias):
    """Pure-JAX reference of the PyTorch Classify.forward (single tensor input)."""
    pooled = jnp.mean(x_nchw.astype(jnp.float32), axis=(2, 3))          # (B, C1)
    w2d = weight.reshape(weight.shape[0], -1).astype(jnp.float32)       # (C2, C1)
    out = pooled @ w2d.T + bias.astype(jnp.float32)[None, :]
    return out.astype(x_nchw.dtype)


if __name__ == "__main__":
    key = jax.random.PRNGKey(0)
    k_x, k_w, k_b = jax.random.split(key, 3)

    B, C1, C2 = 2, 4, 8  # Conv2d(c1=4, c2=8, k=1, s=1, p=autopad(1)=0, groups=1)

    def make_inputs(h, w, dtype):
        x = jax.random.normal(k_x, (B, C1, h, w), dtype=jnp.float32).astype(dtype)
        bound = 1.0 / (C1 ** 0.5)
        wgt = jax.random.uniform(k_w, (C2, C1, 1, 1), dtype=jnp.float32,
                                 minval=-bound, maxval=bound).astype(dtype)
        b = jax.random.uniform(k_b, (C2,), dtype=jnp.float32,
                               minval=-bound, maxval=bound).astype(dtype)
        return x, wgt, b

    def check(name, h, w, dtype=jnp.float32, atol=1e-5, rtol=1e-5, **kw):
        x, wgt, b = make_inputs(h, w, dtype)
        ref = reference_forward(x, wgt, b)
        out = jax.block_until_ready(classify_forward(x, wgt, b, **kw))
        assert out.shape == (B, C2) and out.dtype == x.dtype, f"bad shape/dtype: {name}"
        assert jnp.allclose(out.astype(jnp.float32), ref.astype(jnp.float32),
                            atol=atol, rtol=rtol), f"mismatch vs reference: {name}"

    # 1) Default tiling: lane mode, single spatial chunk.
    check("lanes/single-chunk", 16, 16)
    # 2) Forced 128-lane chunks: multi-step reduction along the "arbitrary" axis.
    check("lanes/multi-chunk", 16, 16, max_hw_tile=128)
    # 3) Forced HW split over the leading "parallel" axis (v7x small-batch path)
    #    with an odd chunk count -> clamped index_map + fully masked overflow chunk.
    check("split/mask/clamp", 16, 24, max_hw_tile=128, force_hw_splits=2)
    # 4) Ragged HW that fits as one block: direct (full-spatial) mode.
    check("direct/ragged", 13, 13)
    # 5) Ragged HW with 128-lane chunks: masked partial last chunk.
    check("lanes/ragged-mask", 16, 20, max_hw_tile=128)
    # 6) bf16 activations/weights (f32 accumulate + f32 finalize matmul in-kernel).
    check("bf16", 16, 16, dtype=jnp.bfloat16, atol=2e-2, rtol=2e-2, max_hw_tile=128)

    print("KERNEL_OK")
</pallas_src>

<mosaic_0001>
module attributes {stable_mosaic.version = 11 : i64} {
  func.func @kernel(%arg0: i32, %arg1: i32, %arg2: i32, %arg3: memref<2x4x256xf32, #tpu.memory_space<vmem>>, %arg4: memref<4x8xf32, #tpu.memory_space<vmem>>, %arg5: memref<1x8xf32, #tpu.memory_space<vmem>>, %arg6: memref<1x2x8xf32, #tpu.memory_space<vmem>>, %arg7: memref<2x4x128xf32, #tpu.memory_space<vmem>>) attributes {dimension_semantics = [#tpu.dimension_semantics<parallel>, #tpu.dimension_semantics<parallel>, #tpu.dimension_semantics<arbitrary>], iteration_bounds = array<i64: 1, 1, 1>, scalar_prefetch = 0 : i64, scratch_operands = 1 : i64, tpu.core_type = #tpu.core_type<tc>, window_params = [{transform_indices = @transform_0, window_bounds = array<i64: 2, 4, 256>}, {pipeline_mode = #tpu.pipeline_mode<synchronous>, transform_indices = @transform_1, window_bounds = array<i64: 4, 8>}, {pipeline_mode = #tpu.pipeline_mode<synchronous>, transform_indices = @transform_2, window_bounds = array<i64: 1, 8>}, {transform_indices = @transform_3, window_bounds = array<i64: 1, 2, 8>}]} {
    %c0_i32 = arith.constant 0 : i32
    %0 = arith.cmpi eq, %arg2, %c0_i32 : i32
    %1 = arith.extui %0 : i1 to i32
    %c0_i32_0 = arith.constant 0 : i32
    %2 = arith.cmpi ne, %1, %c0_i32_0 : i32
    scf.if %2 {
      %cst = arith.constant 0.000000e+00 : f32
      %12 = vector.broadcast %cst : f32 to vector<2x4x128xf32>
      %c0_13 = arith.constant 0 : index
      %c0_14 = arith.constant 0 : index
      %c0_15 = arith.constant 0 : index
      %13 = vector.load %arg7[%c0_13, %c0_14, %c0_15] : memref<2x4x128xf32, #tpu.memory_space<vmem>>, vector<2x4x128xf32>
      tpu.vector_store %arg7[%c0_13, %c0_14, %c0_15], %12 {strides = array<i32>} : memref<2x4x128xf32, #tpu.memory_space<vmem>>, vector<2x4x128xf32>,
    } else {
    }
    %c0 = arith.constant 0 : index
    %c0_1 = arith.constant 0 : index
    %c0_2 = arith.constant 0 : index
    %3 = vector.load %arg3[%c0, %c0_1, %c0_2] : memref<2x4x256xf32, #tpu.memory_space<vmem>>, vector<2x4x128xf32>
    %c0_3 = arith.constant 0 : index
    %c0_4 = arith.constant 0 : index
    %c128 = arith.constant 128 : index
    %4 = vector.load %arg3[%c0_3, %c0_4, %c128] : memref<2x4x256xf32, #tpu.memory_space<vmem>>, vector<2x4x128xf32>
    %5 = arith.addf %3, %4 : vector<2x4x128xf32>
    %c0_5 = arith.constant 0 : index
    %c0_6 = arith.constant 0 : index
    %c0_7 = arith.constant 0 : index
    %6 = vector.load %arg7[%c0_5, %c0_6, %c0_7] : memref<2x4x128xf32, #tpu.memory_space<vmem>>, vector<2x4x128xf32>
    %7 = arith.addf %6, %5 : vector<2x4x128xf32>
    %c0_8 = arith.constant 0 : index
    %c0_9 = arith.constant 0 : index
    %c0_10 = arith.constant 0 : index
    %8 = vector.load %arg7[%c0_8, %c0_9, %c0_10] : memref<2x4x128xf32, #tpu.memory_space<vmem>>, vector<2x4x128xf32>
    tpu.vector_store %arg7[%c0_8, %c0_9, %c0_10], %7 {strides = array<i32>} : memref<2x4x128xf32, #tpu.memory_space<vmem>>, vector<2x4x128xf32>,
    %c0_i32_11 = arith.constant 0 : i32
    %9 = arith.cmpi eq, %arg2, %c0_i32_11 : i32
    %10 = arith.extui %9 : i1 to i32
    %c0_i32_12 = arith.constant 0 : i32
    %11 = arith.cmpi ne, %10, %c0_i32_12 : i32
    scf.if %11 {
      %c0_13 = arith.constant 0 : index
      %c0_14 = arith.constant 0 : index
      %c0_15 = arith.constant 0 : index
      %12 = vector.load %arg7[%c0_13, %c0_14, %c0_15] : memref<2x4x128xf32, #tpu.memory_space<vmem>>, vector<2x4x128xf32>
      %cst = arith.constant dense<0.000000e+00> : vector<2x4xf32>
      %13 = vector.multi_reduction <add>, %12, %cst [2] : vector<2x4x128xf32> to vector<2x4xf32>
      %cst_16 = arith.constant 3.906250e-03 : f32
      %14 = vector.broadcast %cst_16 : f32 to vector<2x4xf32>
      %15 = arith.mulf %13, %14 : vector<2x4xf32>
      %c0_17 = arith.constant 0 : index
      %c0_18 = arith.constant 0 : index
      %16 = vector.load %arg4[%c0_17, %c0_18] : memref<4x8xf32, #tpu.memory_space<vmem>>, vector<4x8xf32>
      %cst_19 = arith.constant dense<0.000000e+00> : vector<2x8xf32>
      %17 = tpu.matmul %15, %16, %cst_19 {dimension_numbers = #tpu.dot_dimension_numbers<[1], [0], [0], [1], [0, 0, 1, 1], [], []>} : vector<2x4xf32>, vector<4x8xf32>, vector<2x8xf32> -> vector<2x8xf32>
      %c0_20 = arith.constant 0 : index
      %c0_21 = arith.constant 0 : index
      %18 = vector.load %arg5[%c0_20, %c0_21] : memref<1x8xf32, #tpu.memory_space<vmem>>, vector<1x8xf32>
      %c0_i32_22 = arith.constant 0 : i32
      %19 = arith.cmpi eq, %arg0, %c0_i32_22 : i32
      %20 = arith.extui %19 : i1 to i32
      %21 = arith.sitofp %20 : i32 to f32
      %22 = vector.broadcast %21 : f32 to vector<1x8xf32>
      %23 = arith.mulf %18, %22 : vector<1x8xf32>
      %24 = vector.broadcast %23 : vector<1x8xf32> to vector<2x8xf32>
      %25 = arith.addf %17, %24 : vector<2x8xf32>
      %c0_23 = arith.constant 0 : index
      %c0_24 = arith.constant 0 : index
      %c0_25 = arith.constant 0 : index
      %26 = vector.load %arg6[%c0_23, %c0_24, %c0_25] : memref<1x2x8xf32, #tpu.memory_space<vmem>>, vector<1x2x8xf32>
      %27 = vector.shape_cast %26 : vector<1x2x8xf32> to vector<2x8xf32>
      %28 = vector.shape_cast %25 : vector<2x8xf32> to vector<1x2x8xf32>
      tpu.vector_store %arg6[%c0_23, %c0_24, %c0_25], %28 {strides = array<i32>} : memref<1x2x8xf32, #tpu.memory_space<vmem>>, vector<1x2x8xf32>,
    } else {
    }
    return
  }
  func.func @transform_0(%arg0: i32, %arg1: i32, %arg2: i32) -> (i32, i32, i32) {
    %c1_i32 = arith.constant 1 : i32
    %0 = arith.muli %arg0, %c1_i32 : i32
    %1 = arith.addi %0, %arg2 : i32
    %c0_i32 = arith.constant 0 : i32
    %c0_i32_0 = arith.constant 0 : i32
    return %arg1, %c0_i32, %1 : i32, i32, i32
  }
  func.func @transform_1(%arg0: i32, %arg1: i32, %arg2: i32) -> (i32, i32) {
    %c0_i32 = arith.constant 0 : i32
    %c0_i32_0 = arith.constant 0 : i32
    %c0_i32_1 = arith.constant 0 : i32
    return %c0_i32, %c0_i32_0 : i32, i32
  }
  func.func @transform_2(%arg0: i32, %arg1: i32, %arg2: i32) -> (i32, i32) {
    %c0_i32 = arith.constant 0 : i32
    %c0_i32_0 = arith.constant 0 : i32
    %c0_i32_1 = arith.constant 0 : i32
    return %c0_i32, %c0_i32_0 : i32, i32
  }
  func.func @transform_3(%arg0: i32, %arg1: i32, %arg2: i32) -> (i32, i32, i32) {
    %c0_i32 = arith.constant 0 : i32
    %c0_i32_0 = arith.constant 0 : i32
    return %arg0, %arg1, %c0_i32 : i32, i32, i32
  }
}

</mosaic_0001>

<llo_original>
// kernel: tpu_custom_call.1
$region0: #{tpu_custom_call.1}
  #allocation0 [shape = 'u32[]', space=smem, size = 0x4, offset = 0x4, fixed_abs, tag = 'smem constant byte address 0x4 - core index']
  #allocation1 [shape = 'u32[144,128]{1,0:T(1,128)}', space=vmem, size = 0x12000, scoped, tag = 'internal scratch']
  #allocation2 [shape = 'f32[2,4,128]{2,1,0:T(4,128)}', space=vmem, size = 0x1000, scoped, tag = 'scratch operand']
  %s0 = inlined_call_operand.hbm [shape: f32[2,4,256], index: 0, kind: input, shape index: {}]
  %s1 = inlined_call_operand.hbm [shape: f32[4,8], index: 1, kind: input, shape index: {}]
  %s2 = inlined_call_operand.vmem [shape: f32[1,8], index: 2, kind: input, shape index: {}]
  %s3 = inlined_call_operand.hbm [shape: f32[1,2,8], index: 3, kind: output, shape index: {}]
  %s4 = sld [smem:[#allocation0]]
  $region38: #{tpu_custom_call.1} parent=0
    _
  %s6 = ssub.s32 1, %s4
  %s7 = scalar_select 0, %s6, %s4
  $region1: #{tpu_custom_call.1} parent=0
    #allocation3 [shape = 'u8[8192]{0}', space=vmem, size = 0x2000, scoped, tag = 'input window, operand 0, single buffered']
    #allocation4 [shape = 's32[1]{0}', space=sflag, size = 0x4, scoped, tag = 'scoped memory for tpu_custom_call.1']
    #allocation5 [shape = 's32[1]{0}', space=sflag, size = 0x4, scoped, tag = 'scoped memory for tpu_custom_call.1']
    #allocation6 [shape = 'u8[2048]{0}', space=vmem, size = 0x800, scoped, tag = 'input window, operand 1, single buffered']
    #allocation7 [shape = 's32[1]{0}', space=sflag, size = 0x4, scoped, tag = 'scoped memory for tpu_custom_call.1']
    #allocation8 [shape = 'u8[1024]{0}', space=vmem, size = 0x400, scoped, tag = 'output window, operand 0, single buffered']
    %8 = vsyncpa [#allocation4], 0
    %9 = vsyncpa [#allocation7], 0
    %10 = vsyncpa [#allocation5], 0
    // Predicated region
    $region2: #{tpu_custom_call.1} parent=1 // pred_check
      _
    $region3: #{tpu_custom_call.1} parent=1 // pred_check_branch
      %12 = sbr.rel (0) target = $region5
    $region4: #{tpu_custom_call.1} parent=1 // pred_region
      %s13 = sadd.s32 0, 0
      %s14 = smul.u32 2, %s13
      %s16 = ssub.s32 256, 256
      %17 = vsyncadd [#allocation4], %s16
      %s18 = smul.addr %s14, 64
      %s19 = scalar_lea.hbm %s0, %s18
      %s20 = sshll.u32 [#allocation3], 4
      %s21 = int_to_ptr.vmem [resolvable:$true] %s20
      %26 = dma.hbm_to_vmem [thread:$0]  %s19, 256, %s21, [#allocation4], 128, 128, 8
    $region5: #{tpu_custom_call.1} parent=1 // pred_fallthru
      _
    // Predicated region
    $region6: #{tpu_custom_call.1} parent=1 // pred_check
      _
    $region7: #{tpu_custom_call.1} parent=1 // pred_check_branch
      %28 = sbr.rel (0) target = $region9
    $region8: #{tpu_custom_call.1} parent=1 // pred_region
      %s30 = ssub.s32 64, 64
      %31 = vsyncadd [#allocation7], %s30
      %s33 = sshll.u32 [#allocation6], 4
      %s34 = int_to_ptr.vmem [resolvable:$true] %s33
      %36 = dma.hbm_to_vmem [thread:$0]  %s1, 64, %s34, [#allocation7]
    $region9: #{tpu_custom_call.1} parent=1 // pred_fallthru
      _
    // Predicated region
    $region10: #{tpu_custom_call.1} parent=1 // pred_check
      _
    $region11: #{tpu_custom_call.1} parent=1 // pred_check_branch
      %38 = sbr.rel (0) target = $region13
    $region12: #{tpu_custom_call.1} parent=1 // pred_region
      _
    $region13: #{tpu_custom_call.1} parent=1 // pred_fallthru
      _
    // Predicated region
    $region14: #{tpu_custom_call.1} parent=1 // pred_check
      _
    $region15: #{tpu_custom_call.1} parent=1 // pred_check_branch
      %40 = sbr.rel (0) target = $region17
    $region16: #{tpu_custom_call.1} parent=1 // pred_region
      %41 = dma.done [#allocation4], 256
    $region17: #{tpu_custom_call.1} parent=1 // pred_fallthru
      _
    // Predicated region
    $region18: #{tpu_custom_call.1} parent=1 // pred_check
      _
    $region19: #{tpu_custom_call.1} parent=1 // pred_check_branch
      %43 = sbr.rel (0) target = $region21
    $region20: #{tpu_custom_call.1} parent=1 // pred_region
      %44 = dma.done [#allocation7], 64
    $region21: #{tpu_custom_call.1} parent=1 // pred_fallthru
      _
    %s45 = sadd.s32 0, 0
    %s46 = smul.u32 2, %s45
    %p47 = scmp.eq.s32.totalorder 0, 0
    // Predicated region
    $region22: #{tpu_custom_call.1} parent=1 // pred_check
      %p48 = pneg %p47
    $region23: #{tpu_custom_call.1} parent=1 // pred_check_branch
      %50 = sbr.rel (%p48) target = $region25
    $region24: #{tpu_custom_call.1} parent=1 // pred_region
      %51 = vst [vmem:[#allocation2] sm:$0xf] 0.0
      %52 = vst [vmem:[#allocation2 + $0x4] sm:$0xf] 0.0
    $region25: #{tpu_custom_call.1} parent=1 // pred_fallthru
      _
    %v53 = vld [vmem:[#allocation3] sm:$0xf]
    %v54 = vld [vmem:[#allocation3 + $0x8] sm:$0xf]
    %v55 = vld [vmem:[#allocation3 + $0x4] sm:$0xf]
    %v56 = vld [vmem:[#allocation3 + $0xc] sm:$0xf]
    %v57 = vadd.f32 %v53, %v55
    %v58 = vadd.f32 %v54, %v56
    %v59 = vld [vmem:[#allocation2] sm:$0xf]
    %v60 = vld [vmem:[#allocation2 + $0x4] sm:$0xf]
    %v61 = vadd.f32 %v59, %v57
    %v62 = vadd.f32 %v60, %v58
    %63 = vst [vmem:[#allocation2] sm:$0xf] %v61
    %64 = vst [vmem:[#allocation2 + $0x4] sm:$0xf] %v62
    // Predicated region
    $region26: #{tpu_custom_call.1} parent=1 // pred_check
      %p65 = pneg %p47
    $region27: #{tpu_custom_call.1} parent=1 // pred_check_branch
      %67 = sbr.rel (%p65) target = $region29
    $region28: #{tpu_custom_call.1} parent=1 // pred_region
      %v68 = vld [vmem:[#allocation2] sm:$0xf]
      %v69 = vld [vmem:[#allocation2 + $0x4] sm:$0xf]
      %vm70 = vcmask 1043456
      %v71 = vsel %vm70, %v68, 0.0
      %72 = vadd.xlane.f32.xlu0 %v71
      %v73 = vpop.xlane.xlu0 %72
      %v74 = vsel %vm70, %v69, 0.0
      %75 = vadd.xlane.f32.xlu0 %v74
      %v76 = vpop.xlane.xlu0 %75
      %v77 = vmul.f32 %v73, 0.00390625
      %v78 = vmul.f32 %v76, 0.00390625
      %v79 = vld [vmem:[#allocation6] sm:$0xf]
      %v80 = vld [vmem:[%s2] sm:$0x1]
      %p81 = scmp.eq.s32.totalorder 0, 0
      %s82 = scalar_select %p81, 1, 0
      %s83 = scvt.s32.f32 %s82
      %v84 = vstv %s83
      %v85 = vmul.f32 %v80, %v84
      %v87 = vlaneseq
      %v88 = vshrl.u32 %v87, 7
      %v89 = vsub.s32 0, %v88
      %v90 = vrot.slane %v85, %v89
      %v94 = vlaneseq
      %v95 = vand.u32 %v94, 127
      %v96 = vlaneseq
      %v97 = vshrl.u32 %v96, 7
      %v98 = vsub.s32 %v95, %v97
      %v99 = vrot.slane %v77, %v98
      %v100 = vlaneseq
      %v101 = vshrl.u32 %v100, 7
      %v102 = vsub.s32 %v95, %v101
      %v103 = vrot.slane %v78, %v102
      %vm104 = vcmask 1041409
      %v105 = vsel %vm104, %v103, %v99
      %vm106 = vcmask 31744
      %v107 = vsel %vm106, %v105, 0
      %v110 = vsel %vm70, %v79, 0
      %112 = vmatprep.subr.mxu0 0.0
      %113 = vmatpush1.msra.mxu0 %v110
      %114 = vmatprep.subr.mxu0 0.0
      %115 = vmatpush1.msra.mxu0 0.0
      %116 = vmatprep.subr.mxu0 0.0
      %117 = vmatpush1.msra.mxu0 0.0
      %118 = vmatprep.subr.mxu0 0.0
      %119 = vmatpush1.msra.mxu0 0.0
      %120 = vmatprep.subr.mxu0 0.0
      %121 = vmatpush1.msra.mxu0 0.0
      %122 = vmatprep.subr.mxu0 0.0
      %123 = vmatpush1.msra.mxu0 0.0
      %124 = vmatprep.subr.mxu0 0.0
      %125 = vmatpush1.msra.mxu0 0.0
      %126 = vmatprep.subr.mxu0 0.0
      %127 = vmatpush1.msra.mxu0 0.0
      %128 = vmatprep.subr.mxu0 0.0
      %129 = vmatpush1.msra.mxu0 0.0
      %130 = vmatprep.subr.mxu0 0.0
      %131 = vmatpush1.msra.mxu0 0.0
      %132 = vmatprep.subr.mxu0 0.0
      %133 = vmatpush1.msra.mxu0 0.0
      %134 = vmatprep.subr.mxu0 0.0
      %135 = vmatpush1.msra.mxu0 0.0
      %136 = vmatprep.subr.mxu0 0.0
      %137 = vmatpush1.msra.mxu0 0.0
      %138 = vmatprep.subr.mxu0 0.0
      %139 = vmatpush1.msra.mxu0 0.0
      %140 = vmatprep.subr.mxu0 0.0
      %141 = vmatpush1.msra.mxu0 0.0
      %142 = vmatprep.subr.mxu0 0.0
      %143 = vmatpush1.msra.mxu0 0.0
      %144 = vmatprep.subr.mxu0 0.0
      %145 = vmatpush1.msra.mxu0 0.0
      %146 = vmatprep.subr.mxu0 0.0
      %147 = vmatpush1.msra.mxu0 0.0
      %148 = vmatprep.subr.mxu0 0.0
      %149 = vmatpush1.msra.mxu0 0.0
      %150 = vmatprep.subr.mxu0 0.0
      %151 = vmatpush1.msra.mxu0 0.0
      %152 = vmatprep.subr.mxu0 0.0
      %153 = vmatpush1.msra.mxu0 0.0
      %154 = vmatprep.subr.mxu0 0.0
      %155 = vmatpush1.msra.mxu0 0.0
      %156 = vmatprep.subr.mxu0 0.0
      %157 = vmatpush1.msra.mxu0 0.0
      %158 = vmatprep.subr.mxu0 0.0
      %159 = vmatpush1.msra.mxu0 0.0
      %160 = vmatprep.subr.mxu0 0.0
      %161 = vmatpush1.msra.mxu0 0.0
      %162 = vmatprep.subr.mxu0 0.0
      %163 = vmatpush1.msra.mxu0 0.0
      %164 = vmatprep.subr.mxu0 0.0
      %165 = vmatpush1.msra.mxu0 0.0
      %166 = vmatprep.subr.mxu0 0.0
      %167 = vmatpush1.msra.mxu0 0.0
      %168 = vmatprep.subr.mxu0 0.0
      %169 = vmatpush1.msra.mxu0 0.0
      %170 = vmatprep.subr.mxu0 0.0
      %171 = vmatpush1.msra.mxu0 0.0
      %172 = vmatprep.subr.mxu0 0.0
      %173 = vmatpush1.msra.mxu0 0.0
      %174 = vmatprep.subr.mxu0 0.0
      %175 = vmatpush1.msra.mxu0 0.0
      %176 = vmatprep.mubr.f32.mxu0 0.0
      %177 = vmatmul.mubr.f32.gmra.mrb[0].mxu0 %v107
      %v178 = vpop.f32.mrb[0].mxu0
      %v179 = vadd.f32 %v90, %v178
      %v180 = vpop.f32.mrb[0].mxu0
      %181 = vdwg.mxu0
      %vm182 = vcmask 58368
      %183 = vst.msk [vmem:[#allocation8] sm:$0x3] %vm182, %v179
    $region29: #{tpu_custom_call.1} parent=1 // pred_fallthru
      _
    // Predicated region
    $region30: #{tpu_custom_call.1} parent=1 // pred_check
      _
    $region31: #{tpu_custom_call.1} parent=1 // pred_check_branch
      %185 = sbr.rel (0) target = $region33
    $region32: #{tpu_custom_call.1} parent=1 // pred_region
      %s187 = ssub.s32 32, 32
      %188 = vsyncadd [#allocation5], %s187
      %s190 = sshll.u32 [#allocation8], 4
      %s191 = int_to_ptr.vmem [resolvable:$true] %s190
      %193 = dma.vmem_to_hbm [thread:$0]  %s191, 32, %s3, [#allocation5]
    $region33: #{tpu_custom_call.1} parent=1 // pred_fallthru
      _
    // Predicated region
    $region34: #{tpu_custom_call.1} parent=1 // pred_check
      _
    $region35: #{tpu_custom_call.1} parent=1 // pred_check_branch
      %195 = sbr.rel (0) target = $region37
    $region36: #{tpu_custom_call.1} parent=1 // pred_region
      %196 = dma.done [#allocation5], 32
    $region37: #{tpu_custom_call.1} parent=1 // pred_fallthru
      _
    %197 = vsyncpa [#allocation4], 1
    %198 = vsyncpa [#allocation7], 1
    %199 = vsyncpa [#allocation5], 1

</llo_original>
